<compile_context>
chip_gen: v5e
topology: v5e:2x2
jax: 0.10.0
libtpu: 0.0.40
codegen_flags: <defaults>
</compile_context>

<pallas_src>
import functools
import math

import jax
import jax.numpy as jnp
from jax.experimental import pallas as pl
from jax.experimental.pallas import tpu as pltpu


def _round_up(n, m):
    return ((n + m - 1) // m) * m


def _sublane_multiple(dtype):
    # sublane packing: f32 -> 8, bf16/f16 -> 16, int8/fp8 -> 32
    return max(8, 32 // jnp.dtype(dtype).itemsize)


def _periodic_embedding_kernel(x_ref, div_ref, o_ref, *, chunk, n_chunks):
    """x_ref: (tm, n_chunks*chunk), div_ref: (1, n_chunks*chunk) f32,
    o_ref: (tm, n_chunks*2*chunk) laid out per chunk as [sin | cos]."""
    x = x_ref[...]
    if x.dtype != jnp.float32:
        x = x.astype(jnp.float32)
    xd = x * div_ref[...]  # div broadcasts over rows
    s = jnp.sin(xd)
    c = jnp.cos(xd)

    if n_chunks == 1 and chunk % 128 == 0:
        # Both halves start on a 128-lane boundary -> two aligned stores.
        o_ref[:, :chunk] = s.astype(o_ref.dtype)
        o_ref[:, chunk:] = c.astype(o_ref.dtype)
    else:
        # Interleave [sin_j | cos_j] per packed row chunk and issue a single
        # full-width store (128-lane dense when n_chunks*2*chunk % 128 == 0).
        pieces = []
        for j in range(n_chunks):
            pieces.append(s[:, j * chunk:(j + 1) * chunk])
            pieces.append(c[:, j * chunk:(j + 1) * chunk])
        o_ref[...] = jnp.concatenate(pieces, axis=-1).astype(o_ref.dtype)


def periodic_embedding(x, *, target_tile_bytes=4 << 20, vmem_cap_bytes=48 << 20):
    """x: (..., D) -> (..., 2*D), matching PyTorch PeriodicEmbedding.forward."""
    orig_shape = x.shape
    D = orig_shape[-1]
    x2d = x.reshape(-1, D)
    M = x2d.shape[0]
    itemsize = jnp.dtype(x.dtype).itemsize
    sub = _sublane_multiple(x.dtype)

    # div_term = exp(arange(D) * -(ln(10000)/D)) in float32 (more accurate than
    # PyTorch's x.dtype computation for bf16 inputs; identical for f32).
    div_1d = jnp.exp(jnp.arange(D, dtype=jnp.float32) * (-(math.log(10000.0) / D)))

    # Row packing: if the logical output row (2*D lanes) is narrower than a
    # vreg (128 lanes) and divides it, pack k logical rows per physical row so
    # the kernel's output tile is 128-lane dense. Wrapper reshapes are
    # contiguous (free); kernel does the per-chunk sin/cos interleave.
    k = 1
    if 2 * D < 128 and 128 % (2 * D) == 0 and M % (128 // (2 * D)) == 0:
        k = 128 // (2 * D)

    m_rows = M // k
    in_cols = k * D
    out_cols = k * 2 * D
    x_in = x2d.reshape(m_rows, in_cols)                 # contiguous -> free
    div_in = jnp.tile(div_1d, k).reshape(1, in_cols)    # tiny, grid-invariant

    # Byte-budgeted row tile (~target_tile_bytes of in+out per step), rounded
    # to sublane packing, clamped to the row count and the VMEM cap.
    row_bytes = (in_cols + out_cols) * itemsize
    tm = max(sub, (target_tile_bytes // row_bytes) // sub * sub)
    tm = min(tm, _round_up(m_rows, sub))
    max_tm_vmem = (vmem_cap_bytes - (2 << 20)) // (2 * row_bytes)
    tm = max(sub, min(tm, (max_tm_vmem // sub) * sub))
    # v7x megacore: make sure the row grid has >= 2 steps when rows allow.
    if pl.cdiv(m_rows, tm) < 2 and m_rows > sub:
        tm = max(sub, _round_up(pl.cdiv(m_rows, 2), sub))

    grid = (pl.cdiv(m_rows, tm),)

    # Explicit VMEM budget: double-buffered x/out tiles + div block + headroom,
    # capped well below v7x's 64 MiB physical VMEM.
    tile_in = tm * in_cols * itemsize
    tile_out = tm * out_cols * itemsize
    vmem_bytes = 2 * (tile_in + tile_out) + in_cols * 4 + (4 << 20)
    vmem_bytes = int(min(max(vmem_bytes, 16 << 20), vmem_cap_bytes))

    kernel = functools.partial(_periodic_embedding_kernel, chunk=D, n_chunks=k)

    cost = pl.CostEstimate(
        flops=M * D,                      # one multiply per input element
        transcendentals=2 * M * D,        # sin + cos
        bytes_accessed=(M * D + M * 2 * D) * itemsize + D * 4,
    )

    out = pl.pallas_call(
        kernel,
        out_shape=jax.ShapeDtypeStruct((m_rows, out_cols), x.dtype),
        grid_spec=pltpu.PrefetchScalarGridSpec(
            num_scalar_prefetch=0,
            grid=grid,
            in_specs=[
                pl.BlockSpec((tm, in_cols), lambda i: (i, 0)),   # x row tile
                pl.BlockSpec((1, in_cols), lambda i: (0, 0)),    # div (invariant)
            ],
            out_specs=pl.BlockSpec((tm, out_cols), lambda i: (i, 0)),
        ),
        compiler_params=pltpu.CompilerParams(
            dimension_semantics=("parallel",),
            vmem_limit_bytes=vmem_bytes,
        ),
        cost_estimate=cost,
    )(x_in, div_in)

    # Unpack physical rows -> logical rows (contiguous reshape, free).
    return out.reshape(orig_shape[:-1] + (2 * D,))


def _reference(x):
    """Pure-JAX reference matching the PyTorch forward."""
    D = x.shape[-1]
    div_term = jnp.exp(jnp.arange(D, dtype=x.dtype) * (-(math.log(10000.0) / D)))
    return jnp.concatenate([jnp.sin(x * div_term), jnp.cos(x * div_term)], axis=-1)


if __name__ == "__main__":
    B, S, D = 2, 8, 32  # batch, seq, input_dim -> output_dim = 64

    key = jax.random.PRNGKey(0)
    x = jax.random.normal(key, (B, S, D), dtype=jnp.float32)

    out = periodic_embedding(x)
    out = jax.block_until_ready(out)

    ref = _reference(x)
    assert out.shape == (B, S, 2 * D)
    assert jnp.allclose(out, ref, atol=1e-5, rtol=1e-5)

    print("KERNEL_OK")
</pallas_src>

<mosaic_0001>
module attributes {stable_mosaic.version = 11 : i64} {
  func.func @_periodic_embedding_kernel(%arg0: i32, %arg1: memref<8x64xf32, #tpu.memory_space<vmem>>, %arg2: memref<1x64xf32, #tpu.memory_space<vmem>>, %arg3: memref<8x128xf32, #tpu.memory_space<vmem>>) attributes {dimension_semantics = [#tpu.dimension_semantics<parallel>], iteration_bounds = array<i64: 1>, scalar_prefetch = 0 : i64, scratch_operands = 0 : i64, tpu.core_type = #tpu.core_type<tc>, window_params = [{transform_indices = @transform_0, window_bounds = array<i64: 8, 64>}, {pipeline_mode = #tpu.pipeline_mode<synchronous>, transform_indices = @transform_1, window_bounds = array<i64: 1, 64>}, {transform_indices = @transform_2, window_bounds = array<i64: 8, 128>}]} {
    %c0 = arith.constant 0 : index
    %c0_0 = arith.constant 0 : index
    %0 = vector.load %arg1[%c0, %c0_0] : memref<8x64xf32, #tpu.memory_space<vmem>>, vector<8x64xf32>
    %c0_1 = arith.constant 0 : index
    %c0_2 = arith.constant 0 : index
    %1 = vector.load %arg2[%c0_1, %c0_2] : memref<1x64xf32, #tpu.memory_space<vmem>>, vector<1x64xf32>
    %2 = vector.broadcast %1 : vector<1x64xf32> to vector<8x64xf32>
    %3 = arith.mulf %0, %2 : vector<8x64xf32>
    %4 = math.sin %3 : vector<8x64xf32>
    %5 = math.cos %3 : vector<8x64xf32>
    %6 = vector.extract_strided_slice %4 {offsets = [0, 0], sizes = [8, 32], strides = [1, 1]} : vector<8x64xf32> to vector<8x32xf32>
    %7 = vector.extract_strided_slice %5 {offsets = [0, 0], sizes = [8, 32], strides = [1, 1]} : vector<8x64xf32> to vector<8x32xf32>
    %8 = vector.extract_strided_slice %4 {offsets = [0, 32], sizes = [8, 32], strides = [1, 1]} : vector<8x64xf32> to vector<8x32xf32>
    %9 = vector.extract_strided_slice %5 {offsets = [0, 32], sizes = [8, 32], strides = [1, 1]} : vector<8x64xf32> to vector<8x32xf32>
    %10 = tpu.concatenate %6, %7, %8, %9 in 1 : vector<8x32xf32>, vector<8x32xf32>, vector<8x32xf32>, vector<8x32xf32> -> vector<8x128xf32>
    %c0_3 = arith.constant 0 : index
    %c0_4 = arith.constant 0 : index
    %11 = vector.load %arg3[%c0_3, %c0_4] : memref<8x128xf32, #tpu.memory_space<vmem>>, vector<8x128xf32>
    tpu.vector_store %arg3[%c0_3, %c0_4], %10 {strides = array<i32>} : memref<8x128xf32, #tpu.memory_space<vmem>>, vector<8x128xf32>,
    return
  }
  func.func @transform_0(%arg0: i32) -> (i32, i32) {
    %c0_i32 = arith.constant 0 : i32
    %c0_i32_0 = arith.constant 0 : i32
    return %arg0, %c0_i32 : i32, i32
  }
  func.func @transform_1(%arg0: i32) -> (i32, i32) {
    %c0_i32 = arith.constant 0 : i32
    %c0_i32_0 = arith.constant 0 : i32
    %c0_i32_1 = arith.constant 0 : i32
    return %c0_i32, %c0_i32_0 : i32, i32
  }
  func.func @transform_2(%arg0: i32) -> (i32, i32) {
    %c0_i32 = arith.constant 0 : i32
    %c0_i32_0 = arith.constant 0 : i32
    return %arg0, %c0_i32 : i32, i32
  }
}

</mosaic_0001>

<llo_original>
// kernel: tpu_custom_call.1
$region0: #{tpu_custom_call.1}
  #allocation0 [shape = 'u32[]', space=smem, size = 0x4, offset = 0x4, fixed_abs, tag = 'smem constant byte address 0x4 - core index']
  #allocation1 [shape = 'u32[72,128]{1,0:T(1,128)}', space=vmem, size = 0x9000, scoped, tag = 'internal scratch']
  %s0 = inlined_call_operand.hbm [shape: f32[8,64], index: 0, kind: input, shape index: {}]
  %s1 = inlined_call_operand.hbm [shape: f32[1,64], index: 1, kind: input, shape index: {}]
  %s2 = inlined_call_operand.hbm [shape: f32[8,128], index: 2, kind: output, shape index: {}]
  %s3 = sld [smem:[#allocation0]]
  $region26: #{tpu_custom_call.1} parent=0
    _
  %s5 = ssub.s32 1, %s3
  %s6 = scalar_select 0, %s5, %s3
  $region1: #{tpu_custom_call.1} parent=0
    #allocation2 [shape = 'u8[4096]{0}', space=vmem, size = 0x1000, scoped, tag = 'input window, operand 0, single buffered']
    #allocation3 [shape = 's32[1]{0}', space=sflag, size = 0x4, scoped, tag = 'scoped memory for tpu_custom_call.1']
    #allocation4 [shape = 's32[1]{0}', space=sflag, size = 0x4, scoped, tag = 'scoped memory for tpu_custom_call.1']
    #allocation5 [shape = 'u8[512]{0}', space=vmem, size = 0x400, scoped, tag = 'input window, operand 1, single buffered']
    #allocation6 [shape = 's32[1]{0}', space=sflag, size = 0x4, scoped, tag = 'scoped memory for tpu_custom_call.1']
    #allocation7 [shape = 'u8[4096]{0}', space=vmem, size = 0x1000, scoped, tag = 'output window, operand 0, single buffered']
    %7 = vsyncpa [#allocation3], 0
    %8 = vsyncpa [#allocation6], 0
    %9 = vsyncpa [#allocation4], 0
    // Predicated region
    $region2: #{tpu_custom_call.1} parent=1 // pred_check
      _
    $region3: #{tpu_custom_call.1} parent=1 // pred_check_branch
      %11 = sbr.rel (0) target = $region5
    $region4: #{tpu_custom_call.1} parent=1 // pred_region
      %13 = vsyncadd [#allocation3], 0
      %s15 = sshll.u32 %s0, 4
      %s16 = int_to_ptr.hbm [resolvable:$true] %s15
      %s17 = sshll.u32 [#allocation2], 4
      %s18 = int_to_ptr.vmem [resolvable:$true] %s17
      %20 = dma.hbm_to_vmem [thread:$0]  %s16, 128, %s18, [#allocation3]
    $region5: #{tpu_custom_call.1} parent=1 // pred_fallthru
      _
    // Predicated region
    $region6: #{tpu_custom_call.1} parent=1 // pred_check
      _
    $region7: #{tpu_custom_call.1} parent=1 // pred_check_branch
      %22 = sbr.rel (0) target = $region9
    $region8: #{tpu_custom_call.1} parent=1 // pred_region
      %24 = vsyncadd [#allocation6], 0
      %s26 = sshll.u32 %s1, 4
      %s27 = int_to_ptr.hbm [resolvable:$true] %s26
      %s28 = sshll.u32 [#allocation5], 4
      %s29 = int_to_ptr.vmem [resolvable:$true] %s28
      %31 = dma.hbm_to_vmem [thread:$0]  %s27, 16, %s29, [#allocation6]
    $region9: #{tpu_custom_call.1} parent=1 // pred_fallthru
      _
    // Predicated region
    $region10: #{tpu_custom_call.1} parent=1 // pred_check
      _
    $region11: #{tpu_custom_call.1} parent=1 // pred_check_branch
      %33 = sbr.rel (0) target = $region13
    $region12: #{tpu_custom_call.1} parent=1 // pred_region
      %35 = dma.done [#allocation3], 128
    $region13: #{tpu_custom_call.1} parent=1 // pred_fallthru
      _
    // Predicated region
    $region14: #{tpu_custom_call.1} parent=1 // pred_check
      _
    $region15: #{tpu_custom_call.1} parent=1 // pred_check_branch
      %37 = sbr.rel (0) target = $region17
    $region16: #{tpu_custom_call.1} parent=1 // pred_region
      %39 = dma.done [#allocation6], 16
    $region17: #{tpu_custom_call.1} parent=1 // pred_fallthru
      _
    %v40 = vld [vmem:[#allocation2] sm:$0xff]
    %v41 = vld [vmem:[#allocation5] sm:$0x1]
    %v43 = vperm.slane %v41, 0
    %v45 = vmul.f32 %v40, %v43
    %v46 = vand.u32 2147483647, %v45
    %vm47 = vcmp.le.f32.partialorder %v46, 0.7853982
    %vm48 = vcmp.lt.s32.totalorder %v45, 0
    %v49 = vand.u32 %v45, 2139095040
    %v50 = vshrl.u32 %v49, 23
    %v51 = vsub.s32 %v50, 127
    %v52 = vand.u32 2147483647, %v45
    %v53 = vand.u32 %v52, 8388607
    %v54 = vor.u32 %v53, 8388608
    %v55 = vsub.s32 0, %v54
    %v56 = vadd.s32 %v51, 1
    %vm57 = vcmp.gt.s32.totalorder %v56, 0
    %v58 = vsel %vm57, %v56, 0
    %v59 = vshrl.u32 %v58, 5
    %v60 = vand.u32 %v58, 31
    %v61 = vsub.s32 32, %v60
    %v62 = vshrl.u32 683565275, %v61
    %v63 = vshll.u32 683565275, %v60
    %v64 = vshrl.u32 2475754826, %v61
    %v65 = vor.u32 %v63, %v64
    %v66 = vshll.u32 2475754826, %v60
    %v67 = vshrl.u32 2131351028, %v61
    %v68 = vor.u32 %v66, %v67
    %v69 = vshll.u32 2131351028, %v60
    %v70 = vshrl.u32 2102212464, %v61
    %v71 = vor.u32 %v69, %v70
    %v72 = vshll.u32 2102212464, %v60
    %v73 = vshrl.u32 920167782, %v61
    %v74 = vor.u32 %v72, %v73
    %v75 = vshll.u32 920167782, %v60
    %v76 = vshrl.u32 1326507024, %v61
    %v77 = vor.u32 %v75, %v76
    %vm78 = vcmp.lt.s32.totalorder %v59, 1
    %vm79 = vcmp.lt.s32.totalorder %v59, 2
    %vm80 = vcmp.lt.s32.totalorder %v59, 3
    %vm81 = vcmp.lt.s32.totalorder %v59, 4
    %v82 = vsel %vm78, %v62, %v65
    %v83 = vsel %vm81, %v71, 2102212464
    %v84 = vsel %vm80, %v68, %v83
    %v85 = vsel %vm79, %v82, %v84
    %v86 = vsel %vm78, %v65, %v68
    %v87 = vsel %vm81, %v74, 920167782
    %v88 = vsel %vm80, %v71, %v87
    %v89 = vsel %vm79, %v86, %v88
    %v90 = vsel %vm78, %v68, %v71
    %v91 = vsel %vm81, %v77, 1326507024
    %v92 = vsel %vm80, %v74, %v91
    %v93 = vsel %vm79, %v90, %v92
    %v94 = vshll.u32 %v54, 8
    %v95 = vand.u32 %v94, 65535
    %v96 = vshrl.u32 %v94, 16
    %v97 = vand.u32 %v93, 65535
    %v98 = vshrl.u32 %v93, 16
    %v99 = vmul.u32 %v95, %v97
    %v100 = vmul.u32 %v95, %v98
    %v101 = vmul.u32 %v96, %v97
    %v102 = vmul.u32 %v96, %v98
    %v103 = vshll.u32 %v100, 16
    %v104 = vshrl.u32 %v100, 16
    %v105 = vshll.u32 %v101, 16
    %v106 = vshrl.u32 %v101, 16
    %vm107 = vc.u32 %v99, %v103
    %v108 = vsel %vm107, 1, 0
    %v109 = vadd.s32 %v99, %v103
    %v110 = vadd.s32 %v102, %v108
    %vm111 = vc.u32 %v109, %v105
    %v112 = vsel %vm111, 1, 0
    %v113 = vadd.s32 %v109, %v105
    %v114 = vadd.s32 %v110, %v112
    %v115 = vadd.s32 %v114, %v104
    %v116 = vadd.s32 %v115, %v106
    %v117 = vand.u32 %v94, 65535
    %v118 = vshrl.u32 %v94, 16
    %v119 = vand.u32 %v89, 65535
    %v120 = vshrl.u32 %v89, 16
    %v121 = vmul.u32 %v117, %v119
    %v122 = vmul.u32 %v117, %v120
    %v123 = vmul.u32 %v118, %v119
    %v124 = vmul.u32 %v118, %v120
    %v125 = vshll.u32 %v122, 16
    %v126 = vshrl.u32 %v122, 16
    %v127 = vshll.u32 %v123, 16
    %v128 = vshrl.u32 %v123, 16
    %vm129 = vc.u32 %v121, %v125
    %v130 = vsel %vm129, 1, 0
    %v131 = vadd.s32 %v121, %v125
    %v132 = vadd.s32 %v124, %v130
    %vm133 = vc.u32 %v131, %v127
    %v134 = vsel %vm133, 1, 0
    %v135 = vadd.s32 %v131, %v127
    %v136 = vadd.s32 %v132, %v134
    %v137 = vadd.s32 %v136, %v126
    %v138 = vadd.s32 %v137, %v128
    %v139 = vmul.u32 %v94, %v85
    %v140 = vadd.s32 %v116, %v135
    %vm141 = vc.u32 %v116, %v135
    %v142 = vadd.s32 %v138, 1
    %v143 = vsel %vm141, %v142, %v138
    %v144 = vadd.s32 %v139, %v143
    %v145 = vadd.s32 %v144, 536870912
    %v146 = vshrl.u32 %v145, 30
    %v147 = vshll.u32 %v146, 30
    %v148 = vsub.s32 %v144, %v147
    %vm149 = vcmp.lt.s32.totalorder %v148, 0
    %v150 = vsub.s32 0, %v148
    %v151 = vsel %vm149, %v150, %v148
    %v152 = vclz %v151
    %v153 = vsub.s32 %v152, 2
    %vm154 = vcmp.gt.s32.totalorder 0, %v153
    %v155 = vsel %vm154, 0, %v153
    %v156 = vsub.s32 32, %v155
    %v157 = vshll.u32 %v148, %v155
    %v158 = vshrl.u32 %v140, %v156
    %v159 = vor.u32 %v157, %v158
    %v160 = vsub.s32 4294967266, %v155
    %v161 = vadd.s32 %v160, 127
    %v162 = vshll.u32 %v161, 23
    %v163 = vor.u32 4788187, %v162
    %v164 = vand.u32 2147483647, %v163
    %v166 = vcvt.s32.f32 %v159
    %v167 = vmul.f32 %v166, %v164
    %v168 = vxor.u32 %v167, 2147483648
    %v169 = vsel %vm48, %v168, %v167
    %v170 = vsub.s32 4, %v146
    %v171 = vsel %vm48, %v170, %v146
    %v172 = vsel %vm47, %v45, %v169
    %v173 = vsel %vm47, 0, %v171
    %v174 = vmul.f32 %v172, %v172
    %v175 = vmul.f32 %v174, -0.001358992
    %v176 = vadd.f32 %v175, 0.041655596
    %v177 = vmul.f32 %v174, %v176
    %v178 = vadd.f32 %v177, -0.4999988
    %v179 = vmul.f32 %v174, %v178
    %v180 = vadd.f32 1.0, %v179
    %v181 = vmul.f32 %v172, %v172
    %v182 = vmul.f32 %v181, -0.00019511016
    %v183 = vadd.f32 %v182, 0.008332121
    %v184 = vmul.f32 %v181, %v183
    %v185 = vadd.f32 %v184, -0.16666654
    %v186 = vmul.f32 %v181, %v185
    %v187 = vadd.f32 %v186, 1.0
    %v188 = vmul.f32 %v187, %v172
    %vm189 = vweird.f32 %v45
    %v190 = vadd.s32 %v173, 3
    %v191 = vand.u32 %v190, 3
    %vm192 = vcmp.lt.s32.totalorder %v191, 2
    %vm193 = vcmp.eq.s32.totalorder %v191, 0
    %v194 = vxor.u32 %v188, 2147483648
    %v195 = vsel %vm193, %v180, %v194
    %vm196 = vcmp.eq.s32.totalorder %v191, 2
    %v197 = vxor.u32 %v180, 2147483648
    %v198 = vsel %vm196, %v197, %v188
    %v199 = vsel %vm192, %v195, %v198
    %v200 = vsel %vm189, nan, %v199
    %v201 = vand.u32 2147483647, %v45
    %vm202 = vcmp.le.f32.partialorder %v201, 0.7853982
    %vm203 = vcmp.lt.s32.totalorder %v45, 0
    %v204 = vand.u32 %v45, 2139095040
    %v205 = vshrl.u32 %v204, 23
    %v206 = vsub.s32 %v205, 127
    %v207 = vand.u32 2147483647, %v45
    %v208 = vand.u32 %v207, 8388607
    %v209 = vor.u32 %v208, 8388608
    %v210 = vsub.s32 0, %v209
    %v211 = vadd.s32 %v206, 1
    %vm212 = vcmp.gt.s32.totalorder %v211, 0
    %v213 = vsel %vm212, %v211, 0
    %v214 = vshrl.u32 %v213, 5
    %v215 = vand.u32 %v213, 31
    %v216 = vsub.s32 32, %v215
    %v217 = vshrl.u32 683565275, %v216
    %v218 = vshll.u32 683565275, %v215
    %v219 = vshrl.u32 2475754826, %v216
    %v220 = vor.u32 %v218, %v219
    %v221 = vshll.u32 2475754826, %v215
    %v222 = vshrl.u32 2131351028, %v216
    %v223 = vor.u32 %v221, %v222
    %v224 = vshll.u32 2131351028, %v215
    %v225 = vshrl.u32 2102212464, %v216
    %v226 = vor.u32 %v224, %v225
    %v227 = vshll.u32 2102212464, %v215
    %v228 = vshrl.u32 920167782, %v216
    %v229 = vor.u32 %v227, %v228
    %v230 = vshll.u32 920167782, %v215
    %v231 = vshrl.u32 1326507024, %v216
    %v232 = vor.u32 %v230, %v231
    %vm233 = vcmp.lt.s32.totalorder %v214, 1
    %vm234 = vcmp.lt.s32.totalorder %v214, 2
    %vm235 = vcmp.lt.s32.totalorder %v214, 3
    %vm236 = vcmp.lt.s32.totalorder %v214, 4
    %v237 = vsel %vm233, %v217, %v220
    %v238 = vsel %vm236, %v226, 2102212464
    %v239 = vsel %vm235, %v223, %v238
    %v240 = vsel %vm234, %v237, %v239
    %v241 = vsel %vm233, %v220, %v223
    %v242 = vsel %vm236, %v229, 920167782
    %v243 = vsel %vm235, %v226, %v242
    %v244 = vsel %vm234, %v241, %v243
    %v245 = vsel %vm233, %v223, %v226
    %v246 = vsel %vm236, %v232, 1326507024
    %v247 = vsel %vm235, %v229, %v246
    %v248 = vsel %vm234, %v245, %v247
    %v249 = vshll.u32 %v209, 8
    %v250 = vand.u32 %v249, 65535
    %v251 = vshrl.u32 %v249, 16
    %v252 = vand.u32 %v248, 65535
    %v253 = vshrl.u32 %v248, 16
    %v254 = vmul.u32 %v250, %v252
    %v255 = vmul.u32 %v250, %v253
    %v256 = vmul.u32 %v251, %v252
    %v257 = vmul.u32 %v251, %v253
    %v258 = vshll.u32 %v255, 16
    %v259 = vshrl.u32 %v255, 16
    %v260 = vshll.u32 %v256, 16
    %v261 = vshrl.u32 %v256, 16
    %vm262 = vc.u32 %v254, %v258
    %v263 = vsel %vm262, 1, 0
    %v264 = vadd.s32 %v254, %v258
    %v265 = vadd.s32 %v257, %v263
    %vm266 = vc.u32 %v264, %v260
    %v267 = vsel %vm266, 1, 0
    %v268 = vadd.s32 %v264, %v260
    %v269 = vadd.s32 %v265, %v267
    %v270 = vadd.s32 %v269, %v259
    %v271 = vadd.s32 %v270, %v261
    %v272 = vand.u32 %v249, 65535
    %v273 = vshrl.u32 %v249, 16
    %v274 = vand.u32 %v244, 65535
    %v275 = vshrl.u32 %v244, 16
    %v276 = vmul.u32 %v272, %v274
    %v277 = vmul.u32 %v272, %v275
    %v278 = vmul.u32 %v273, %v274
    %v279 = vmul.u32 %v273, %v275
    %v280 = vshll.u32 %v277, 16
    %v281 = vshrl.u32 %v277, 16
    %v282 = vshll.u32 %v278, 16
    %v283 = vshrl.u32 %v278, 16
    %vm284 = vc.u32 %v276, %v280
    %v285 = vsel %vm284, 1, 0
    %v286 = vadd.s32 %v276, %v280
    %v287 = vadd.s32 %v279, %v285
    %vm288 = vc.u32 %v286, %v282
    %v289 = vsel %vm288, 1, 0
    %v290 = vadd.s32 %v286, %v282
    %v291 = vadd.s32 %v287, %v289
    %v292 = vadd.s32 %v291, %v281
    %v293 = vadd.s32 %v292, %v283
    %v294 = vmul.u32 %v249, %v240
    %v295 = vadd.s32 %v271, %v290
    %vm296 = vc.u32 %v271, %v290
    %v297 = vadd.s32 %v293, 1
    %v298 = vsel %vm296, %v297, %v293
    %v299 = vadd.s32 %v294, %v298
    %v300 = vadd.s32 %v299, 536870912
    %v301 = vshrl.u32 %v300, 30
    %v302 = vshll.u32 %v301, 30
    %v303 = vsub.s32 %v299, %v302
    %vm304 = vcmp.lt.s32.totalorder %v303, 0
    %v305 = vsub.s32 0, %v303
    %v306 = vsel %vm304, %v305, %v303
    %v307 = vclz %v306
    %v308 = vsub.s32 %v307, 2
    %vm309 = vcmp.gt.s32.totalorder 0, %v308
    %v310 = vsel %vm309, 0, %v308
    %v311 = vsub.s32 32, %v310
    %v312 = vshll.u32 %v303, %v310
    %v313 = vshrl.u32 %v295, %v311
    %v314 = vor.u32 %v312, %v313
    %v315 = vsub.s32 4294967266, %v310
    %v316 = vadd.s32 %v315, 127
    %v317 = vshll.u32 %v316, 23
    %v318 = vor.u32 4788187, %v317
    %v319 = vand.u32 2147483647, %v318
    %v321 = vcvt.s32.f32 %v314
    %v322 = vmul.f32 %v321, %v319
    %v323 = vxor.u32 %v322, 2147483648
    %v324 = vsel %vm203, %v323, %v322
    %v325 = vsub.s32 4, %v301
    %v326 = vsel %vm203, %v325, %v301
    %v327 = vsel %vm202, %v45, %v324
    %v328 = vsel %vm202, 0, %v326
    %v329 = vmul.f32 %v327, %v327
    %v330 = vmul.f32 %v329, -0.001358992
    %v331 = vadd.f32 %v330, 0.041655596
    %v332 = vmul.f32 %v329, %v331
    %v333 = vadd.f32 %v332, -0.4999988
    %v334 = vmul.f32 %v329, %v333
    %v335 = vadd.f32 1.0, %v334
    %v336 = vmul.f32 %v327, %v327
    %v337 = vmul.f32 %v336, -0.00019511016
    %v338 = vadd.f32 %v337, 0.008332121
    %v339 = vmul.f32 %v336, %v338
    %v340 = vadd.f32 %v339, -0.16666654
    %v341 = vmul.f32 %v336, %v340
    %v342 = vadd.f32 %v341, 1.0
    %v343 = vmul.f32 %v342, %v327
    %vm344 = vweird.f32 %v45
    %v345 = vand.u32 %v328, 3
    %vm346 = vcmp.lt.s32.totalorder %v345, 2
    %vm347 = vcmp.eq.s32.totalorder %v345, 0
    %v348 = vxor.u32 %v343, 2147483648
    %v349 = vsel %vm347, %v335, %v348
    %vm350 = vcmp.eq.s32.totalorder %v345, 2
    %v351 = vxor.u32 %v335, 2147483648
    %v352 = vsel %vm350, %v351, %v343
    %v353 = vsel %vm346, %v349, %v352
    %v354 = vsel %vm344, nan, %v353
    %356 = vrot.lane.b32.xlu0 %v354, 32
    %v357 = vpop.permute.xlu0 %356
    %360 = vrot.lane.b32.xlu0 %v200, 32
    %v361 = vpop.permute.xlu0 %360
    %363 = vrot.lane.b32.xlu0 %v354, 64
    %v364 = vpop.permute.xlu0 %363
    %vm366 = vcmask 261120
    %v367 = vsel %vm366, %v200, %v357
    %vm368 = vcmask 523264
    %v369 = vsel %vm368, %v367, %v361
    %vm370 = vcmask 785408
    %v371 = vsel %vm370, %v369, %v364
    %372 = vst [vmem:[#allocation7] sm:$0xff] %v371
    // Predicated region
    $region18: #{tpu_custom_call.1} parent=1 // pred_check
      _
    $region19: #{tpu_custom_call.1} parent=1 // pred_check_branch
      %374 = sbr.rel (0) target = $region21
    $region20: #{tpu_custom_call.1} parent=1 // pred_region
      %376 = vsyncadd [#allocation4], 0
      %s378 = sshll.u32 [#allocation7], 4
      %s379 = int_to_ptr.vmem [resolvable:$true] %s378
      %s380 = sshll.u32 %s2, 4
      %s381 = int_to_ptr.hbm [resolvable:$true] %s380
      %383 = dma.vmem_to_hbm [thread:$0]  %s379, 128, %s381, [#allocation4]
    $region21: #{tpu_custom_call.1} parent=1 // pred_fallthru
      _
    // Predicated region
    $region22: #{tpu_custom_call.1} parent=1 // pred_check
      _
    $region23: #{tpu_custom_call.1} parent=1 // pred_check_branch
      %385 = sbr.rel (0) target = $region25
    $region24: #{tpu_custom_call.1} parent=1 // pred_region
      %387 = dma.done [#allocation4], 128
    $region25: #{tpu_custom_call.1} parent=1 // pred_fallthru
      _
    %388 = vsyncpa [#allocation3], 1
    %389 = vsyncpa [#allocation6], 1
    %390 = vsyncpa [#allocation4], 1

</llo_original>
